<compile_context>
chip_gen: v5e
topology: v5e:2x2
jax: 0.10.0
libtpu: 0.0.40
codegen_flags: <defaults>
</compile_context>

<pallas_src>
from functools import partial

import jax
import jax.numpy as jnp
from jax.experimental import pallas as pl
from jax.experimental.pallas import tpu as pltpu

_LANES = 1024             # slab lane width: multiple of 128 -> unmasked full-width vst
_MAX_BLOCK_ROWS = 512     # 512 x 1024 x 4B = 2 MiB per f32 block per array
_PALLAS_MIN_ELEMS = 1024  # below this, plain-jnp fast path


# ---------------------------------------------------------------------------
# Layout helpers
# ---------------------------------------------------------------------------

def _prep(t):
    t = jnp.asarray(t)
    if not jnp.issubdtype(t.dtype, jnp.floating):
        t = t.astype(jnp.float32)
    return t


def _sublane(dtype):
    # f32 -> 8, bf16/f16 -> 16 (native packed sublane tile)
    return max(8, 32 // jnp.dtype(dtype).itemsize)


def _to_slab(flat):
    """Pad a flat vector only to 1024-element granularity and reshape to (rows, 1024)."""
    n = flat.shape[0]
    n_pad = -(-n // _LANES) * _LANES
    if n_pad != n:                       # skip the extra HBM pass when already aligned
        flat = jnp.pad(flat, (0, n_pad - n))
    return flat.reshape(n_pad // _LANES, _LANES)


def _from_slab(out, n, shape):
    flat = out.reshape(-1)
    if flat.shape[0] != n:               # slice only when padding was actually added
        flat = flat[:n]
    return flat.reshape(shape)


def _pick_rows_per_block(rows, sublane):
    # Big blocks to amortize ~0.35 us/step grid overhead, but keep >= 2 grid
    # steps when possible so v7x's two TensorCores both get work.
    if rows <= 2 * sublane:
        return rows                      # block == full array (grid = 1)
    half = -(-((rows + 1) // 2) // sublane) * sublane
    return min(_MAX_BLOCK_ROWS, half)


def _launch(kernel, slabs, *, scalar_prefetch=None):
    rows, lanes = slabs[0].shape
    dtype = slabs[0].dtype
    rpb = _pick_rows_per_block(rows, _sublane(dtype))
    n_pref = 0 if scalar_prefetch is None else len(scalar_prefetch)
    # index_map ignores any trailing scalar-prefetch refs
    spec = pl.BlockSpec((rpb, lanes), lambda i, *_: (i, 0))
    gs = pltpu.PrefetchScalarGridSpec(
        num_scalar_prefetch=n_pref,
        grid=(pl.cdiv(rows, rpb),),
        in_specs=[spec] * len(slabs),
        out_specs=spec,
    )
    args = (list(scalar_prefetch) if scalar_prefetch else []) + list(slabs)
    return pl.pallas_call(
        kernel,
        out_shape=jax.ShapeDtypeStruct((rows, lanes), dtype),
        grid_spec=gs,
        compiler_params=pltpu.CompilerParams(dimension_semantics=("parallel",)),
    )(*args)


# ---------------------------------------------------------------------------
# Kernels (pure VPU elementwise; f32 compute, caller-dtype I/O)
# ---------------------------------------------------------------------------

def _forward_kernel(t_ref, o_ref, *, beta_min, coef):
    # beta(t) = beta_min + (beta_max - beta_min) * t^2
    t = t_ref[...].astype(jnp.float32)
    o_ref[...] = (coef * (t * t) + beta_min).astype(o_ref.dtype)


def _cumulate_const_ti_kernel(t_ref, o_ref, *, ti, c3, beta_min):
    # F(t) - F(ti) = (t - ti) * (c3*(t^2 + t*ti + ti^2) + beta_min),  c3 = (max-min)/3
    t = t_ref[...].astype(jnp.float32)
    o_ref[...] = ((t - ti) * (c3 * (t * t + t * ti + ti * ti) + beta_min)).astype(o_ref.dtype)


def _cumulate_smem_ti_kernel(ti_ref, t_ref, o_ref, *, c3, beta_min):
    # ti arrives as a (1,) f32 scalar-prefetch SMEM ref (jit-safe, no host sync).
    ti = ti_ref[0]
    t = t_ref[...].astype(jnp.float32)
    o_ref[...] = ((t - ti) * (c3 * (t * t + t * ti + ti * ti) + beta_min)).astype(o_ref.dtype)


def _cumulate_pair_kernel(t_ref, ti_ref, o_ref, *, c3, beta_min):
    t = t_ref[...].astype(jnp.float32)
    ti = ti_ref[...].astype(jnp.float32)
    o_ref[...] = ((t - ti) * (c3 * (t * t + t * ti + ti * ti) + beta_min)).astype(o_ref.dtype)


# ---------------------------------------------------------------------------
# Public wrappers (match QuadraticSchedule.forward / .cumulate semantics)
# ---------------------------------------------------------------------------

def quadratic_schedule_forward(t, beta_min=0.1, beta_max=20.0):
    beta_min = float(beta_min)
    coef = float(beta_max) - beta_min
    t = _prep(t)
    n = t.size

    if n < _PALLAS_MIN_ELEMS:            # tiny diffusion-timestep batches: pure jnp
        tf = t.astype(jnp.float32)
        return (coef * (tf * tf) + beta_min).astype(t.dtype)

    slab = _to_slab(t.reshape(-1))
    out = _launch(partial(_forward_kernel, beta_min=beta_min, coef=coef), [slab])
    return _from_slab(out, n, t.shape)


def quadratic_schedule_cumulate(t, t_init=0.0, beta_min=0.1, beta_max=20.0):
    beta_min = float(beta_min)
    c3 = (float(beta_max) - beta_min) / 3.0
    t = _prep(t)
    n = t.size

    if n < _PALLAS_MIN_ELEMS:            # tiny inputs: pure jnp (broadcasting handles ti)
        tf = t.astype(jnp.float32)
        tif = jnp.asarray(t_init, dtype=jnp.float32)
        res = (tf - tif) * (c3 * (tf * tf + tf * tif + tif * tif) + beta_min)
        return res.astype(t.dtype)

    slab = _to_slab(t.reshape(-1))

    # Python-number t_init: fold at trace time (no extra input at all).
    if isinstance(t_init, (int, float)) and not isinstance(t_init, bool):
        kernel = partial(_cumulate_const_ti_kernel, ti=float(t_init),
                         c3=c3, beta_min=beta_min)
        out = _launch(kernel, [slab])
        return _from_slab(out, n, t.shape)

    ti_arr = jnp.asarray(t_init)
    if ti_arr.size == 1:
        # Traced / device scalar: scalar-prefetch SMEM input, no float() host sync,
        # no broadcast materialization.
        ti_smem = ti_arr.reshape(1).astype(jnp.float32)
        kernel = partial(_cumulate_smem_ti_kernel, c3=c3, beta_min=beta_min)
        out = _launch(kernel, [slab], scalar_prefetch=(ti_smem,))
        return _from_slab(out, n, t.shape)

    # Elementwise t_init: single fused two-input pass over HBM.
    # (broadcast_to is a no-op when shapes already match; size-1 handled above)
    ti_full = jnp.broadcast_to(ti_arr, t.shape).astype(slab.dtype)
    ti_slab = _to_slab(ti_full.reshape(-1))
    kernel = partial(_cumulate_pair_kernel, c3=c3, beta_min=beta_min)
    out = _launch(kernel, [slab, ti_slab])
    return _from_slab(out, n, t.shape)


class QuadraticSchedule:
    """Drop-in analogue of the PyTorch module."""

    def __init__(self, min=0.1, max=20):
        self.min = float(min)
        self.max = float(max)

    def forward(self, t):
        return quadratic_schedule_forward(t, self.min, self.max)

    __call__ = forward

    def cumulate(self, t, t_init=0):
        return quadratic_schedule_cumulate(t, t_init, self.min, self.max)


# ---------------------------------------------------------------------------
# Self-test
# ---------------------------------------------------------------------------

if __name__ == "__main__":
    key = jax.random.PRNGKey(0)
    beta_min, beta_max = 0.1, 20.0
    sched = QuadraticSchedule(beta_min, beta_max)

    def fwd_ref(t):
        return beta_min + (beta_max - beta_min) * t ** 2

    def F_ref(t):
        return (1.0 / 3.0) * t ** 3 * (beta_max - beta_min) + t * beta_min

    k0, k1, k2, k3 = jax.random.split(key, 4)

    # 1) Small batch of diffusion timesteps (8,) -> jnp fast path.
    t_small = jax.random.uniform(k0, (8,), dtype=jnp.float32)
    out = jax.block_until_ready(sched(t_small))
    assert out.shape == t_small.shape
    assert jnp.allclose(out, fwd_ref(t_small), atol=1e-5, rtol=1e-5)
    cum0 = jax.block_until_ready(sched.cumulate(t_small, 0.0))
    assert jnp.allclose(cum0, F_ref(t_small) - F_ref(0.0), atol=1e-5, rtol=1e-5)

    # 2) (2,4,16,16) = 2048 elems -> Pallas path, no padding needed.
    t_mid = jax.random.uniform(k1, (2, 4, 16, 16), dtype=jnp.float32)
    out_mid = jax.block_until_ready(sched(t_mid))
    assert out_mid.shape == t_mid.shape
    assert jnp.allclose(out_mid, fwd_ref(t_mid), atol=1e-5, rtol=1e-5)

    # 3) Python-scalar t_init (trace-time folded), Pallas path.
    cum_mid = jax.block_until_ready(sched.cumulate(t_mid, 0.25))
    assert jnp.allclose(cum_mid, F_ref(t_mid) - F_ref(0.25), atol=1e-4, rtol=1e-4)

    # 4) Traced/device scalar t_init under jit -> SMEM scalar-prefetch path.
    ti_dev = jnp.float32(0.125)
    cum_dev = jax.block_until_ready(
        jax.jit(quadratic_schedule_cumulate, static_argnums=(2, 3))(
            t_mid, ti_dev, beta_min, beta_max))
    assert jnp.allclose(cum_dev, F_ref(t_mid) - F_ref(0.125), atol=1e-4, rtol=1e-4)

    # 5) Elementwise t_init -> fused two-input kernel.
    ti_arr = jax.random.uniform(k2, t_mid.shape, dtype=jnp.float32) * 0.5
    cum_pair = jax.block_until_ready(sched.cumulate(t_mid, ti_arr))
    assert jnp.allclose(cum_pair, F_ref(t_mid) - F_ref(ti_arr), atol=1e-4, rtol=1e-4)

    # 6) Large, non-multiple-of-1024 -> tail padding + ragged multi-step grid.
    t_big = jax.random.uniform(k3, (20000,), dtype=jnp.float32)
    out_big = jax.block_until_ready(sched(t_big))
    assert out_big.shape == t_big.shape
    assert jnp.allclose(out_big, fwd_ref(t_big), atol=1e-5, rtol=1e-5)
    cum_big = jax.block_until_ready(sched.cumulate(t_big, 0.0))
    assert jnp.allclose(cum_big, F_ref(t_big), atol=1e-4, rtol=1e-4)

    # 7) bf16 caller: dtype preserved end-to-end (half the HBM traffic),
    #    f32 compute inside the kernel.
    t_bf = jax.random.uniform(k0, (4096,), dtype=jnp.float32).astype(jnp.bfloat16)
    out_bf = jax.block_until_ready(sched(t_bf))
    assert out_bf.dtype == jnp.bfloat16
    assert jnp.allclose(out_bf.astype(jnp.float32),
                        fwd_ref(t_bf.astype(jnp.float32)),
                        atol=1e-1, rtol=2e-2)

    print("KERNEL_OK")
</pallas_src>

<mosaic_0001>
module attributes {stable_mosaic.version = 11 : i64} {
  func.func @_forward_kernel(%arg0: i32, %arg1: memref<2x1024xf32, #tpu.memory_space<vmem>>, %arg2: memref<2x1024xf32, #tpu.memory_space<vmem>>) attributes {dimension_semantics = [#tpu.dimension_semantics<parallel>], iteration_bounds = array<i64: 1>, scalar_prefetch = 0 : i64, scratch_operands = 0 : i64, tpu.core_type = #tpu.core_type<tc>, window_params = [{transform_indices = @transform_0, window_bounds = array<i64: 2, 1024>}, {transform_indices = @transform_1, window_bounds = array<i64: 2, 1024>}]} {
    %c0 = arith.constant 0 : index
    %c0_0 = arith.constant 0 : index
    %0 = vector.load %arg1[%c0, %c0_0] : memref<2x1024xf32, #tpu.memory_space<vmem>>, vector<2x1024xf32>
    %1 = arith.mulf %0, %0 : vector<2x1024xf32>
    %cst = arith.constant 1.990000e+01 : f32
    %2 = vector.broadcast %cst : f32 to vector<2x1024xf32>
    %3 = arith.mulf %2, %1 : vector<2x1024xf32>
    %cst_1 = arith.constant 1.000000e-01 : f32
    %4 = vector.broadcast %cst_1 : f32 to vector<2x1024xf32>
    %5 = arith.addf %3, %4 : vector<2x1024xf32>
    %c0_2 = arith.constant 0 : index
    %c0_3 = arith.constant 0 : index
    %6 = vector.load %arg2[%c0_2, %c0_3] : memref<2x1024xf32, #tpu.memory_space<vmem>>, vector<2x1024xf32>
    tpu.vector_store %arg2[%c0_2, %c0_3], %5 {strides = array<i32>} : memref<2x1024xf32, #tpu.memory_space<vmem>>, vector<2x1024xf32>,
    return
  }
  func.func @transform_0(%arg0: i32) -> (i32, i32) {
    %c0_i32 = arith.constant 0 : i32
    %c0_i32_0 = arith.constant 0 : i32
    return %arg0, %c0_i32 : i32, i32
  }
  func.func @transform_1(%arg0: i32) -> (i32, i32) {
    %c0_i32 = arith.constant 0 : i32
    %c0_i32_0 = arith.constant 0 : i32
    return %arg0, %c0_i32 : i32, i32
  }
}

</mosaic_0001>

<llo_original>
// kernel: tpu_custom_call.1
$region0: #{tpu_custom_call.1}
  #allocation0 [shape = 'u32[]', space=smem, size = 0x4, offset = 0x4, fixed_abs, tag = 'smem constant byte address 0x4 - core index']
  #allocation1 [shape = 'u32[72,128]{1,0:T(1,128)}', space=vmem, size = 0x9000, scoped, tag = 'internal scratch']
  %s0 = inlined_call_operand.hbm [shape: f32[2,1024], index: 0, kind: input, shape index: {}]
  %s1 = inlined_call_operand.hbm [shape: f32[2,1024], index: 1, kind: output, shape index: {}]
  %s2 = sld [smem:[#allocation0]]
  $region18: #{tpu_custom_call.1} parent=0
    _
  %s4 = ssub.s32 1, %s2
  %s5 = scalar_select 0, %s4, %s2
  $region1: #{tpu_custom_call.1} parent=0
    #allocation2 [shape = 'u8[8192]{0}', space=vmem, size = 0x2000, scoped, tag = 'input window, operand 0, single buffered']
    #allocation3 [shape = 's32[1]{0}', space=sflag, size = 0x4, scoped, tag = 'scoped memory for tpu_custom_call.1']
    #allocation4 [shape = 's32[1]{0}', space=sflag, size = 0x4, scoped, tag = 'scoped memory for tpu_custom_call.1']
    #allocation5 [shape = 'u8[8192]{0}', space=vmem, size = 0x2000, scoped, tag = 'output window, operand 0, single buffered']
    %6 = vsyncpa [#allocation3], 0
    %7 = vsyncpa [#allocation4], 0
    // Predicated region
    $region2: #{tpu_custom_call.1} parent=1 // pred_check
      _
    $region3: #{tpu_custom_call.1} parent=1 // pred_check_branch
      %9 = sbr.rel (0) target = $region5
    $region4: #{tpu_custom_call.1} parent=1 // pred_region
      %11 = vsyncadd [#allocation3], 0
      %s13 = sshll.u32 %s0, 4
      %s14 = int_to_ptr.hbm [resolvable:$true] %s13
      %s15 = sshll.u32 [#allocation2], 4
      %s16 = int_to_ptr.vmem [resolvable:$true] %s15
      %18 = dma.hbm_to_vmem [thread:$0]  %s14, 256, %s16, [#allocation3]
    $region5: #{tpu_custom_call.1} parent=1 // pred_fallthru
      _
    // Predicated region
    $region6: #{tpu_custom_call.1} parent=1 // pred_check
      _
    $region7: #{tpu_custom_call.1} parent=1 // pred_check_branch
      %20 = sbr.rel (0) target = $region9
    $region8: #{tpu_custom_call.1} parent=1 // pred_region
      %22 = dma.done [#allocation3], 256
    $region9: #{tpu_custom_call.1} parent=1 // pred_fallthru
      _
    %v23 = vld [vmem:[#allocation2] sm:$0xff]
    %v24 = vld [vmem:[#allocation2 + $0x8] sm:$0xff]
    %v25 = vmul.f32 %v23, %v23
    %v26 = vmul.f32 %v24, %v24
    %v27 = vmul.f32 %v25, 19.9
    %v28 = vmul.f32 %v26, 19.9
    %v29 = vadd.f32 %v27, 0.1
    %v30 = vadd.f32 %v28, 0.1
    %31 = vst [vmem:[#allocation5] sm:$0xff] %v29
    %32 = vst [vmem:[#allocation5 + $0x8] sm:$0xff] %v30
    // Predicated region
    $region10: #{tpu_custom_call.1} parent=1 // pred_check
      _
    $region11: #{tpu_custom_call.1} parent=1 // pred_check_branch
      %34 = sbr.rel (0) target = $region13
    $region12: #{tpu_custom_call.1} parent=1 // pred_region
      %36 = vsyncadd [#allocation4], 0
      %s38 = sshll.u32 [#allocation5], 4
      %s39 = int_to_ptr.vmem [resolvable:$true] %s38
      %s40 = sshll.u32 %s1, 4
      %s41 = int_to_ptr.hbm [resolvable:$true] %s40
      %43 = dma.vmem_to_hbm [thread:$0]  %s39, 256, %s41, [#allocation4]
    $region13: #{tpu_custom_call.1} parent=1 // pred_fallthru
      _
    // Predicated region
    $region14: #{tpu_custom_call.1} parent=1 // pred_check
      _
    $region15: #{tpu_custom_call.1} parent=1 // pred_check_branch
      %45 = sbr.rel (0) target = $region17
    $region16: #{tpu_custom_call.1} parent=1 // pred_region
      %47 = dma.done [#allocation4], 256
    $region17: #{tpu_custom_call.1} parent=1 // pred_fallthru
      _
    %48 = vsyncpa [#allocation3], 1
    %49 = vsyncpa [#allocation4], 1

</llo_original>
